<compile_context>
chip_gen: v6e
topology: v6e:2x2x1
jax: 0.10.0
libtpu: 0.0.40
codegen_flags: <defaults>
</compile_context>

<pallas_src>
import jax
import jax.numpy as jnp
from jax.experimental import pallas as pl
from jax.experimental.pallas import tpu as pltpu


_LANE = 128


# --------------------------------------------------------------------------
# helpers
# --------------------------------------------------------------------------
def _refined_reciprocal(d):
    # EUP approximate reciprocal + one Newton-Raphson step -> ~f32 accuracy.
    inv = pl.reciprocal(d, approx=True)
    return inv * (2.0 - d * inv)


def _sublane_multiple(dtype):
    # min sublane tile: f32 -> 8, bf16 -> 16, int8/fp8 -> 32
    itemsize = jnp.dtype(dtype).itemsize
    return 8 * max(1, 4 // itemsize)


def _vmem_capacity_bytes():
    try:
        info = pltpu.get_tpu_info()
        cap = int(getattr(info, "vmem_capacity_bytes", 0) or 0)
        if cap > 0:
            return cap
    except Exception:
        pass
    return 64 << 20  # conservative (v7x per-TensorCore VMEM)


def _choose_rows(total_rows, row_bytes, sub, target_bytes, other_steps):
    """Rows per block: ~target_bytes, sublane-aligned, prefer exact divisors,
    and keep >= 2 grid steps for v7x megacore when the shape allows it."""
    r = max(1, target_bytes // max(1, row_bytes))
    if r >= total_rows:
        r = total_rows  # full extent: always layout-legal
    else:
        r = max(sub, (r // sub) * sub)
        r = min(r, total_rows)
        if total_rows % r != 0:
            # prefer a divisor (avoids a masked partial last block), but only
            # if it doesn't shrink the block by more than ~2x.
            cand = r
            while cand >= max(sub, r // 2):
                if total_rows % cand == 0:
                    r = cand
                    break
                cand -= sub
    # megacore: avoid collapsing to a single grid step when splittable.
    if other_steps * pl.cdiv(total_rows, r) < 2 and total_rows >= 2 * sub:
        half = -(-((total_rows + 1) // 2) // sub) * sub
        r = min(max(sub, half), total_rows)
    return r


def _pad_last_to_lane(arr, pad_value):
    """Pad the last axis up to a multiple of 128 so stores stay lane-dense."""
    last = arr.shape[-1]
    padded = -(-last // _LANE) * _LANE
    if padded == last:
        return arr
    pad = [(0, 0)] * (arr.ndim - 1) + [(0, padded - last)]
    return jnp.pad(arr, pad, constant_values=pad_value)


# --------------------------------------------------------------------------
# kernels
# --------------------------------------------------------------------------
def _softmax2d_kernel(x_ref, o_ref):
    # x_ref / o_ref: (TR, Lp) in VMEM
    x = x_ref[...].astype(jnp.float32)
    m = jnp.max(x, axis=-1, keepdims=True)
    e = jnp.exp(x - m)
    s = jnp.sum(e, axis=-1, keepdims=True)
    o_ref[...] = (e * _refined_reciprocal(s)).astype(o_ref.dtype)


def _weighted_softmax_kernel(x_ref, w_ref, o_ref):
    # x_ref / o_ref: (1, H, TQ, Lp), w_ref: (1, TQ, Lp).
    # Per-head loop (trace-time unrolled, H small) keeps live f32 temporaries
    # at O(TQ*Lp) instead of O(H*TQ*Lp) -- no materialized weight broadcast.
    w = w_ref[0].astype(jnp.float32)                    # (TQ, Lp), upcast once
    n_heads = x_ref.shape[1]
    for h in range(n_heads):
        x = x_ref[0, h].astype(jnp.float32)             # (TQ, Lp)
        m = jnp.max(x, axis=-1, keepdims=True)
        e = jnp.exp(x - m)
        # softmax(x)*w / sum(softmax(x)*w) == e*w / sum(e*w)
        r = e * w
        d = jnp.sum(r, axis=-1, keepdims=True)
        o_ref[0, h] = (r * _refined_reciprocal(d)).astype(o_ref.dtype)


# --------------------------------------------------------------------------
# wrapper
# --------------------------------------------------------------------------
def weighted_softmax(x, weight=None, dim=-1):
    """Pallas implementation of WeightedSoftMax.forward.

    x:      attention scores; weighted path expects (B, H, Lq, Lk).
    weight: optional (B, Lq, Lk), broadcast over the head axis H.
    dim:    softmax axis; kernel implements the dim=-1 hot path used in ACT.
    """
    if dim is None:
        dim = -1
    assert dim in (-1, x.ndim - 1), "kernel implements softmax over the last axis"
    # TODO(synk): other `dim` values would require a transpose in glue code.
    assert jnp.issubdtype(x.dtype, jnp.floating)

    cap = _vmem_capacity_bytes()
    itemsize = jnp.dtype(x.dtype).itemsize
    sub = _sublane_multiple(x.dtype)
    # ~4 MiB x blocks (HBM-bound sweet spot), but never let buffered I/O plus
    # in-kernel f32 temporaries exceed ~85% of physical VMEM.
    target_bytes = min(4 << 20, cap // 12)
    neg = float(jnp.finfo(x.dtype).min)

    # ---------------- plain softmax path: flatten to (rows, Lk) -------------
    if weight is None:
        orig_shape = x.shape
        lk = x.shape[-1]
        x2 = _pad_last_to_lane(x.reshape(-1, lk), neg)
        rows, lp = x2.shape

        tr = _choose_rows(rows, lp * itemsize, sub, target_bytes, 1)
        grid = (pl.cdiv(rows, tr),)

        blk = tr * lp * itemsize
        need = 2 * 2 * blk + 3 * tr * lp * 4 + (2 << 20)
        vmem_limit = int(min(max(need, 16 << 20), int(0.85 * cap)))

        n_elem = rows * lp
        out = pl.pallas_call(
            _softmax2d_kernel,
            out_shape=jax.ShapeDtypeStruct((rows, lp), x.dtype),
            grid_spec=pltpu.PrefetchScalarGridSpec(
                num_scalar_prefetch=0,
                grid=grid,
                in_specs=[pl.BlockSpec((tr, lp), lambda i: (i, 0))],
                out_specs=pl.BlockSpec((tr, lp), lambda i: (i, 0)),
            ),
            compiler_params=pltpu.CompilerParams(
                dimension_semantics=("parallel",),
                vmem_limit_bytes=vmem_limit,
            ),
            cost_estimate=pl.CostEstimate(
                flops=5 * n_elem,
                transcendentals=n_elem,
                bytes_accessed=2 * n_elem * itemsize,
            ),
        )(x2)
        if lp != lk:
            out = out[:, :lk]
        return out.reshape(orig_shape)

    # ---------------- weighted path: (B, H, Lq, Lk) with (B, Lq, Lk) weight --
    assert x.ndim == 4, "weighted path expects (B, H, Lq, Lk) scores"
    B, H, Lq, Lk = x.shape
    assert weight.shape == (B, Lq, Lk), "weight is broadcast over heads (unsqueeze(1))"

    xp = _pad_last_to_lane(x, neg)            # padded keys contribute exp(...) ~ 0
    wp = _pad_last_to_lane(weight, 0)         # padded keys contribute 0 to the sum
    Lp = xp.shape[-1]
    w_itemsize = jnp.dtype(weight.dtype).itemsize
    sub_eff = max(sub, _sublane_multiple(weight.dtype))

    # Rows of Lq per grid step; one Lq row of the x block carries all H heads,
    # so weight HBM traffic stays 1/H of x traffic.
    TQ = _choose_rows(Lq, H * Lp * itemsize, sub_eff, target_bytes, B)
    grid = (B, pl.cdiv(Lq, TQ))

    blk_x = H * TQ * Lp * itemsize
    blk_w = TQ * Lp * w_itemsize
    temps = 6 * TQ * Lp * 4                   # per-head f32 temporaries + w upcast
    need = 2 * (2 * blk_x + blk_w) + temps + (2 << 20)
    vmem_limit = int(min(max(need, 16 << 20), int(0.85 * cap)))

    n_elem = B * H * Lq * Lp
    out = pl.pallas_call(
        _weighted_softmax_kernel,
        out_shape=jax.ShapeDtypeStruct(xp.shape, x.dtype),
        grid_spec=pltpu.PrefetchScalarGridSpec(
            num_scalar_prefetch=0,
            grid=grid,
            in_specs=[
                pl.BlockSpec((1, H, TQ, Lp), lambda b, q: (b, 0, q, 0)),
                pl.BlockSpec((1, TQ, Lp), lambda b, q: (b, q, 0)),
            ],
            out_specs=pl.BlockSpec((1, H, TQ, Lp), lambda b, q: (b, 0, q, 0)),
        ),
        compiler_params=pltpu.CompilerParams(
            dimension_semantics=("parallel", "parallel"),
            vmem_limit_bytes=vmem_limit,
        ),
        cost_estimate=pl.CostEstimate(
            flops=6 * n_elem,
            transcendentals=n_elem,
            bytes_accessed=2 * n_elem * itemsize + B * Lq * Lp * w_itemsize,
        ),
    )(xp, wp)
    if Lp != Lk:
        out = out[..., :Lk]
    return out


# --------------------------------------------------------------------------
# reference + self-test
# --------------------------------------------------------------------------
def _reference(x, weight=None):
    p = jax.nn.softmax(x, axis=-1)
    if weight is not None:
        r = p * weight[:, None, :, :]
        return r / jnp.sum(r, axis=-1, keepdims=True)
    return p


if __name__ == "__main__":
    key = jax.random.PRNGKey(0)
    kx, kw, kx2, kw2 = jax.random.split(key, 4)

    # Small attention-score shaped inputs (B, H, Lq, Lk).
    B, H, Lq, Lk = 2, 4, 8, 128
    x = jax.random.normal(kx, (B, H, Lq, Lk), dtype=jnp.float32)
    # weight (e.g. cluster member counts) -- strictly positive, deterministic.
    weight = jax.random.uniform(kw, (B, Lq, Lk), dtype=jnp.float32,
                                minval=0.5, maxval=4.0)

    out_w = weighted_softmax(x, weight)
    out_plain = weighted_softmax(x, None)

    # A non-128-multiple key length exercises the lane-padding path.
    Lk2 = 100
    x2 = jax.random.normal(kx2, (B, H, Lq, Lk2), dtype=jnp.float32)
    weight2 = jax.random.uniform(kw2, (B, Lq, Lk2), dtype=jnp.float32,
                                 minval=0.5, maxval=4.0)
    out_w2 = weighted_softmax(x2, weight2)

    jax.block_until_ready((out_w, out_plain, out_w2))

    ref_w = _reference(x, weight)
    ref_plain = _reference(x, None)
    ref_w2 = _reference(x2, weight2)

    assert jnp.allclose(out_w, ref_w, atol=1e-5, rtol=1e-5)
    assert jnp.allclose(out_plain, ref_plain, atol=1e-5, rtol=1e-5)
    assert jnp.allclose(out_w2, ref_w2, atol=1e-5, rtol=1e-5)
    assert jnp.allclose(jnp.sum(out_w, axis=-1), 1.0, atol=1e-5)
    assert jnp.allclose(jnp.sum(out_plain, axis=-1), 1.0, atol=1e-5)
    assert jnp.allclose(jnp.sum(out_w2, axis=-1), 1.0, atol=1e-5)

    print("KERNEL_OK")
</pallas_src>

<mosaic_0001>
module attributes {stable_mosaic.version = 11 : i64} {
  func.func @_weighted_softmax_kernel(%arg0: i32, %arg1: i32, %arg2: memref<1x4x8x128xf32, #tpu.memory_space<vmem>>, %arg3: memref<1x8x128xf32, #tpu.memory_space<vmem>>, %arg4: memref<1x4x8x128xf32, #tpu.memory_space<vmem>>) attributes {dimension_semantics = [#tpu.dimension_semantics<parallel>, #tpu.dimension_semantics<parallel>], iteration_bounds = array<i64: 2, 1>, scalar_prefetch = 0 : i64, scratch_operands = 0 : i64, tpu.core_type = #tpu.core_type<tc>, window_params = [{transform_indices = @transform_0, window_bounds = array<i64: 1, 4, 8, 128>}, {transform_indices = @transform_1, window_bounds = array<i64: 1, 8, 128>}, {transform_indices = @transform_2, window_bounds = array<i64: 1, 4, 8, 128>}]} {
    %c0 = arith.constant 0 : index
    %c0_0 = arith.constant 0 : index
    %c0_1 = arith.constant 0 : index
    %0 = vector.load %arg3[%c0, %c0_0, %c0_1] : memref<1x8x128xf32, #tpu.memory_space<vmem>>, vector<1x8x128xf32>
    %1 = vector.shape_cast %0 : vector<1x8x128xf32> to vector<8x128xf32>
    %c0_2 = arith.constant 0 : index
    %c0_3 = arith.constant 0 : index
    %c0_4 = arith.constant 0 : index
    %c0_5 = arith.constant 0 : index
    %2 = vector.load %arg2[%c0_2, %c0_3, %c0_4, %c0_5] : memref<1x4x8x128xf32, #tpu.memory_space<vmem>>, vector<1x1x8x128xf32>
    %3 = vector.shape_cast %2 : vector<1x1x8x128xf32> to vector<8x128xf32>
    %cst = arith.constant dense<0xFF800000> : vector<8xf32>
    %4 = vector.multi_reduction <maximumf>, %3, %cst [1] : vector<8x128xf32> to vector<8xf32>
    %5 = vector.shape_cast %4 : vector<8xf32> to vector<8x1xf32>
    %6 = vector.broadcast %5 : vector<8x1xf32> to vector<8x128xf32>
    %7 = arith.subf %3, %6 : vector<8x128xf32>
    %8 = math.exp %7 : vector<8x128xf32>
    %9 = arith.mulf %8, %1 : vector<8x128xf32>
    %cst_6 = arith.constant dense<0.000000e+00> : vector<8xf32>
    %10 = vector.multi_reduction <add>, %9, %cst_6 [1] : vector<8x128xf32> to vector<8xf32>
    %11 = vector.shape_cast %10 : vector<8xf32> to vector<8x1xf32>
    %12 = tpu.reciprocal %11 {approx = true} : vector<8x1xf32> -> vector<8x1xf32>
    %13 = arith.mulf %11, %12 : vector<8x1xf32>
    %cst_7 = arith.constant 2.000000e+00 : f32
    %14 = vector.broadcast %cst_7 : f32 to vector<8x1xf32>
    %15 = arith.subf %14, %13 : vector<8x1xf32>
    %16 = arith.mulf %12, %15 : vector<8x1xf32>
    %17 = vector.broadcast %16 : vector<8x1xf32> to vector<8x128xf32>
    %18 = arith.mulf %9, %17 : vector<8x128xf32>
    %c0_8 = arith.constant 0 : index
    %c0_9 = arith.constant 0 : index
    %c0_10 = arith.constant 0 : index
    %c0_11 = arith.constant 0 : index
    %19 = vector.load %arg4[%c0_8, %c0_9, %c0_10, %c0_11] : memref<1x4x8x128xf32, #tpu.memory_space<vmem>>, vector<1x1x8x128xf32>
    %20 = vector.shape_cast %19 : vector<1x1x8x128xf32> to vector<8x128xf32>
    %21 = vector.shape_cast %18 : vector<8x128xf32> to vector<1x1x8x128xf32>
    tpu.vector_store %arg4[%c0_8, %c0_9, %c0_10, %c0_11], %21 {strides = array<i32>} : memref<1x4x8x128xf32, #tpu.memory_space<vmem>>, vector<1x1x8x128xf32>,
    %c0_12 = arith.constant 0 : index
    %c1 = arith.constant 1 : index
    %c0_13 = arith.constant 0 : index
    %c0_14 = arith.constant 0 : index
    %22 = vector.load %arg2[%c0_12, %c1, %c0_13, %c0_14] : memref<1x4x8x128xf32, #tpu.memory_space<vmem>>, vector<1x1x8x128xf32>
    %23 = vector.shape_cast %22 : vector<1x1x8x128xf32> to vector<8x128xf32>
    %cst_15 = arith.constant dense<0xFF800000> : vector<8xf32>
    %24 = vector.multi_reduction <maximumf>, %23, %cst_15 [1] : vector<8x128xf32> to vector<8xf32>
    %25 = vector.shape_cast %24 : vector<8xf32> to vector<8x1xf32>
    %26 = vector.broadcast %25 : vector<8x1xf32> to vector<8x128xf32>
    %27 = arith.subf %23, %26 : vector<8x128xf32>
    %28 = math.exp %27 : vector<8x128xf32>
    %29 = arith.mulf %28, %1 : vector<8x128xf32>
    %cst_16 = arith.constant dense<0.000000e+00> : vector<8xf32>
    %30 = vector.multi_reduction <add>, %29, %cst_16 [1] : vector<8x128xf32> to vector<8xf32>
    %31 = vector.shape_cast %30 : vector<8xf32> to vector<8x1xf32>
    %32 = tpu.reciprocal %31 {approx = true} : vector<8x1xf32> -> vector<8x1xf32>
    %33 = arith.mulf %31, %32 : vector<8x1xf32>
    %cst_17 = arith.constant 2.000000e+00 : f32
    %34 = vector.broadcast %cst_17 : f32 to vector<8x1xf32>
    %35 = arith.subf %34, %33 : vector<8x1xf32>
    %36 = arith.mulf %32, %35 : vector<8x1xf32>
    %37 = vector.broadcast %36 : vector<8x1xf32> to vector<8x128xf32>
    %38 = arith.mulf %29, %37 : vector<8x128xf32>
    %c0_18 = arith.constant 0 : index
    %c1_19 = arith.constant 1 : index
    %c0_20 = arith.constant 0 : index
    %c0_21 = arith.constant 0 : index
    %39 = vector.load %arg4[%c0_18, %c1_19, %c0_20, %c0_21] : memref<1x4x8x128xf32, #tpu.memory_space<vmem>>, vector<1x1x8x128xf32>
    %40 = vector.shape_cast %39 : vector<1x1x8x128xf32> to vector<8x128xf32>
    %41 = vector.shape_cast %38 : vector<8x128xf32> to vector<1x1x8x128xf32>
    tpu.vector_store %arg4[%c0_18, %c1_19, %c0_20, %c0_21], %41 {strides = array<i32>} : memref<1x4x8x128xf32, #tpu.memory_space<vmem>>, vector<1x1x8x128xf32>,
    %c0_22 = arith.constant 0 : index
    %c2 = arith.constant 2 : index
    %c0_23 = arith.constant 0 : index
    %c0_24 = arith.constant 0 : index
    %42 = vector.load %arg2[%c0_22, %c2, %c0_23, %c0_24] : memref<1x4x8x128xf32, #tpu.memory_space<vmem>>, vector<1x1x8x128xf32>
    %43 = vector.shape_cast %42 : vector<1x1x8x128xf32> to vector<8x128xf32>
    %cst_25 = arith.constant dense<0xFF800000> : vector<8xf32>
    %44 = vector.multi_reduction <maximumf>, %43, %cst_25 [1] : vector<8x128xf32> to vector<8xf32>
    %45 = vector.shape_cast %44 : vector<8xf32> to vector<8x1xf32>
    %46 = vector.broadcast %45 : vector<8x1xf32> to vector<8x128xf32>
    %47 = arith.subf %43, %46 : vector<8x128xf32>
    %48 = math.exp %47 : vector<8x128xf32>
    %49 = arith.mulf %48, %1 : vector<8x128xf32>
    %cst_26 = arith.constant dense<0.000000e+00> : vector<8xf32>
    %50 = vector.multi_reduction <add>, %49, %cst_26 [1] : vector<8x128xf32> to vector<8xf32>
    %51 = vector.shape_cast %50 : vector<8xf32> to vector<8x1xf32>
    %52 = tpu.reciprocal %51 {approx = true} : vector<8x1xf32> -> vector<8x1xf32>
    %53 = arith.mulf %51, %52 : vector<8x1xf32>
    %cst_27 = arith.constant 2.000000e+00 : f32
    %54 = vector.broadcast %cst_27 : f32 to vector<8x1xf32>
    %55 = arith.subf %54, %53 : vector<8x1xf32>
    %56 = arith.mulf %52, %55 : vector<8x1xf32>
    %57 = vector.broadcast %56 : vector<8x1xf32> to vector<8x128xf32>
    %58 = arith.mulf %49, %57 : vector<8x128xf32>
    %c0_28 = arith.constant 0 : index
    %c2_29 = arith.constant 2 : index
    %c0_30 = arith.constant 0 : index
    %c0_31 = arith.constant 0 : index
    %59 = vector.load %arg4[%c0_28, %c2_29, %c0_30, %c0_31] : memref<1x4x8x128xf32, #tpu.memory_space<vmem>>, vector<1x1x8x128xf32>
    %60 = vector.shape_cast %59 : vector<1x1x8x128xf32> to vector<8x128xf32>
    %61 = vector.shape_cast %58 : vector<8x128xf32> to vector<1x1x8x128xf32>
    tpu.vector_store %arg4[%c0_28, %c2_29, %c0_30, %c0_31], %61 {strides = array<i32>} : memref<1x4x8x128xf32, #tpu.memory_space<vmem>>, vector<1x1x8x128xf32>,
    %c0_32 = arith.constant 0 : index
    %c3 = arith.constant 3 : index
    %c0_33 = arith.constant 0 : index
    %c0_34 = arith.constant 0 : index
    %62 = vector.load %arg2[%c0_32, %c3, %c0_33, %c0_34] : memref<1x4x8x128xf32, #tpu.memory_space<vmem>>, vector<1x1x8x128xf32>
    %63 = vector.shape_cast %62 : vector<1x1x8x128xf32> to vector<8x128xf32>
    %cst_35 = arith.constant dense<0xFF800000> : vector<8xf32>
    %64 = vector.multi_reduction <maximumf>, %63, %cst_35 [1] : vector<8x128xf32> to vector<8xf32>
    %65 = vector.shape_cast %64 : vector<8xf32> to vector<8x1xf32>
    %66 = vector.broadcast %65 : vector<8x1xf32> to vector<8x128xf32>
    %67 = arith.subf %63, %66 : vector<8x128xf32>
    %68 = math.exp %67 : vector<8x128xf32>
    %69 = arith.mulf %68, %1 : vector<8x128xf32>
    %cst_36 = arith.constant dense<0.000000e+00> : vector<8xf32>
    %70 = vector.multi_reduction <add>, %69, %cst_36 [1] : vector<8x128xf32> to vector<8xf32>
    %71 = vector.shape_cast %70 : vector<8xf32> to vector<8x1xf32>
    %72 = tpu.reciprocal %71 {approx = true} : vector<8x1xf32> -> vector<8x1xf32>
    %73 = arith.mulf %71, %72 : vector<8x1xf32>
    %cst_37 = arith.constant 2.000000e+00 : f32
    %74 = vector.broadcast %cst_37 : f32 to vector<8x1xf32>
    %75 = arith.subf %74, %73 : vector<8x1xf32>
    %76 = arith.mulf %72, %75 : vector<8x1xf32>
    %77 = vector.broadcast %76 : vector<8x1xf32> to vector<8x128xf32>
    %78 = arith.mulf %69, %77 : vector<8x128xf32>
    %c0_38 = arith.constant 0 : index
    %c3_39 = arith.constant 3 : index
    %c0_40 = arith.constant 0 : index
    %c0_41 = arith.constant 0 : index
    %79 = vector.load %arg4[%c0_38, %c3_39, %c0_40, %c0_41] : memref<1x4x8x128xf32, #tpu.memory_space<vmem>>, vector<1x1x8x128xf32>
    %80 = vector.shape_cast %79 : vector<1x1x8x128xf32> to vector<8x128xf32>
    %81 = vector.shape_cast %78 : vector<8x128xf32> to vector<1x1x8x128xf32>
    tpu.vector_store %arg4[%c0_38, %c3_39, %c0_40, %c0_41], %81 {strides = array<i32>} : memref<1x4x8x128xf32, #tpu.memory_space<vmem>>, vector<1x1x8x128xf32>,
    return
  }
  func.func @transform_0(%arg0: i32, %arg1: i32) -> (i32, i32, i32, i32) {
    %c0_i32 = arith.constant 0 : i32
    %c0_i32_0 = arith.constant 0 : i32
    %c0_i32_1 = arith.constant 0 : i32
    return %arg0, %c0_i32, %arg1, %c0_i32_0 : i32, i32, i32, i32
  }
  func.func @transform_1(%arg0: i32, %arg1: i32) -> (i32, i32, i32) {
    %c0_i32 = arith.constant 0 : i32
    %c0_i32_0 = arith.constant 0 : i32
    return %arg0, %arg1, %c0_i32 : i32, i32, i32
  }
  func.func @transform_2(%arg0: i32, %arg1: i32) -> (i32, i32, i32, i32) {
    %c0_i32 = arith.constant 0 : i32
    %c0_i32_0 = arith.constant 0 : i32
    %c0_i32_1 = arith.constant 0 : i32
    return %arg0, %c0_i32, %arg1, %c0_i32_0 : i32, i32, i32, i32
  }
}

</mosaic_0001>

<llo_original>
// kernel: tpu_custom_call.1
$region0: #{tpu_custom_call.1}
  #allocation0 [shape = 'u32[]', space=smem, size = 0x4, offset = 0x4, fixed_abs, tag = 'smem constant byte address 0x4 - core index']
  #allocation1 [shape = 'u32[144,128]{1,0:T(1,128)}', space=vmem, size = 0x12000, scoped, tag = 'internal scratch']
  %s0 = inlined_call_operand.hbm [shape: f32[2,4,8,128], index: 0, kind: input, shape index: {}]
  %s1 = inlined_call_operand.hbm [shape: f32[2,8,128], index: 1, kind: input, shape index: {}]
  %s2 = inlined_call_operand.hbm [shape: f32[2,4,8,128], index: 2, kind: output, shape index: {}]
  %s3 = sld [smem:[#allocation0]]
  $region49: #{tpu_custom_call.1} parent=0
    _
  %s5 = ssub.s32 1, %s3
  %s6 = scalar_select 0, %s5, %s3
  $region1: #{tpu_custom_call.1} parent=0
    #allocation2 [shape = 'u8[32768]{0}', space=vmem, size = 0x8000, scoped, tag = 'input window, operand 0']
    #allocation3 [shape = 's32[2]{0}', space=sflag, size = 0x8, scoped, tag = 'scoped memory for tpu_custom_call.1']
    #allocation4 [shape = 's32[2]{0}', space=sflag, size = 0x8, scoped, tag = 'scoped memory for tpu_custom_call.1']
    #allocation5 [shape = 'u8[8192]{0}', space=vmem, size = 0x2000, scoped, tag = 'input window, operand 1']
    #allocation6 [shape = 's32[2]{0}', space=sflag, size = 0x8, scoped, tag = 'scoped memory for tpu_custom_call.1']
    #allocation7 [shape = 'u8[32768]{0}', space=vmem, size = 0x8000, scoped, tag = 'output window, operand 0']
    %7 = vsyncpa [#allocation3], 0
    %s8 = scalar_lea.sflag [#allocation3], 1
    %9 = vsyncpa %s8, 0
    %10 = vsyncpa [#allocation6], 0
    %s11 = scalar_lea.sflag [#allocation6], 1
    %12 = vsyncpa %s11, 0
    %13 = vsyncpa [#allocation4], 0
    %s14 = scalar_lea.sflag [#allocation4], 1
    %15 = vsyncpa %s14, 0
    loop: start=0, step=1, limit=4
    $region2: #{tpu_custom_call.1} parent=1 // loop_pre_header
      _
    $region3: #{tpu_custom_call.1} parent=1 // loop_header
      %s17 = sphi 0, %s21
      %p18 = scmp.ge.s32.totalorder %s17, 4
      %s24 = sphi 0, %s36
      %s25 = sphi 0, %s32
      %s26 = sphi 0, %s24
      %s27 = sphi 0, %s25
      %s28 = sphi 0, %s26
      %s29 = sphi 0, %s27
      %s41 = sphi 0, %s43
      %s44 = sphi 0, %s41
      %s45 = sphi 0, %s44
      %s61 = sphi 0, %s45
      %s69 = sphi 0, %s71
      %s72 = sphi 0, %s69
      %s73 = sphi 0, %s72
      %s89 = sphi 0, %s73
      %s97 = sphi 0, %s99
      %s100 = sphi 0, %s97
      %s101 = sphi 0, %s100
      %s117 = sphi 0, %s101
    $region4: #{tpu_custom_call.1} parent=1 // loop_header_branch
      %20 = sbr.rel (%p18) target = $region8
    $region5: #{tpu_custom_call.1} parent=1 // loop_body
      %s22 = ssub.s32 %s17, 1
      %s23 = ssub.s32 %s17, 2
      %s30 = sadd.s32 1, %s25
      %p31 = scmp.ge.s32.totalorder %s30, 1
      %s32 = scalar_select %p31, 0, %s30
      %s33 = sadd.s32 1, %s24
      %s34 = scalar_select %p31, %s33, %s24
      %p35 = scmp.ge.s32.totalorder %s34, 2
      %s36 = scalar_select %p35, 0, %s34
      %s37 = ssub.s32 %s24, %s36
      %s38 = ssub.s32 %s25, %s32
      %s39 = sor.u32 %s37, %s38
      %p40 = scmp.eq.s32.totalorder %s39, 0
      %s42 = sadd.s32 %s41, 1
      %s43 = scalar_select %p40, %s41, %s42
      %p46 = pneg %p40
      %p47 = scmp.eq.s32.totalorder %s17, 1
      %p48 = por %p46, %p47
      %p49 = scmp.ne.s32.totalorder %s41, %s44
      %p50 = scmp.eq.s32.totalorder %s17, 0
      %p51 = por %p49, %p50
      %p52 = scmp.ne.s32.totalorder %s41, %s44
      %p53 = scmp.eq.s32.totalorder %s22, 1
      %p54 = por %p52, %p53
      %p55 = scmp.ne.s32.totalorder %s44, %s45
      %p56 = scmp.eq.s32.totalorder %s22, 0
      %p57 = por %p55, %p56
      %p58 = scmp.ne.s32.totalorder %s44, %s45
      %p59 = scmp.eq.s32.totalorder %s23, 1
      %p60 = por %p58, %p59
      %p62 = scmp.ne.s32.totalorder %s45, %s61
      %p63 = scmp.eq.s32.totalorder %s23, 0
      %p64 = por %p62, %p63
      %s65 = ssub.s32 %s24, %s36
      %s66 = ssub.s32 %s25, %s32
      %s67 = sor.u32 %s65, %s66
      %p68 = scmp.eq.s32.totalorder %s67, 0
      %s70 = sadd.s32 %s69, 1
      %s71 = scalar_select %p68, %s69, %s70
      %p74 = pneg %p68
      %p75 = scmp.eq.s32.totalorder %s17, 1
      %p76 = por %p74, %p75
      %p77 = scmp.ne.s32.totalorder %s69, %s72
      %p78 = scmp.eq.s32.totalorder %s17, 0
      %p79 = por %p77, %p78
      %p80 = scmp.ne.s32.totalorder %s69, %s72
      %p81 = scmp.eq.s32.totalorder %s22, 1
      %p82 = por %p80, %p81
      %p83 = scmp.ne.s32.totalorder %s72, %s73
      %p84 = scmp.eq.s32.totalorder %s22, 0
      %p85 = por %p83, %p84
      %p86 = scmp.ne.s32.totalorder %s72, %s73
      %p87 = scmp.eq.s32.totalorder %s23, 1
      %p88 = por %p86, %p87
      %p90 = scmp.ne.s32.totalorder %s73, %s89
      %p91 = scmp.eq.s32.totalorder %s23, 0
      %p92 = por %p90, %p91
      %s93 = ssub.s32 %s24, %s36
      %s94 = ssub.s32 %s25, %s32
      %s95 = sor.u32 %s93, %s94
      %p96 = scmp.eq.s32.totalorder %s95, 0
      %s98 = sadd.s32 %s97, 1
      %s99 = scalar_select %p96, %s97, %s98
      %p102 = pneg %p96
      %p103 = scmp.eq.s32.totalorder %s17, 1
      %p104 = por %p102, %p103
      %p105 = scmp.ne.s32.totalorder %s97, %s100
      %p106 = scmp.eq.s32.totalorder %s17, 0
      %p107 = por %p105, %p106
      %p108 = scmp.ne.s32.totalorder %s97, %s100
      %p109 = scmp.eq.s32.totalorder %s22, 1
      %p110 = por %p108, %p109
      %p111 = scmp.ne.s32.totalorder %s100, %s101
      %p112 = scmp.eq.s32.totalorder %s22, 0
      %p113 = por %p111, %p112
      %p114 = scmp.ne.s32.totalorder %s100, %s101
      %p115 = scmp.eq.s32.totalorder %s23, 1
      %p116 = por %p114, %p115
      %p118 = scmp.ne.s32.totalorder %s101, %s117
      %p119 = scmp.eq.s32.totalorder %s23, 0
      %p120 = por %p118, %p119
      %p121 = scmp.le.s32.totalorder 1, %s17
      %p122 = scmp.lt.s32.totalorder %s17, 3
      %p123 = pnand %p121, %p122
      %p124 = pneg %p123
      // Predicated region
      $region9: #{tpu_custom_call.1} parent=5 // pred_check
        _
      $region10: #{tpu_custom_call.1} parent=5 // pred_check_branch
        %126 = sbr.rel (%p123) target = $region12
      $region11: #{tpu_custom_call.1} parent=5 // pred_region
        %s127 = ssub.s32 %s17, 1
      $region12: #{tpu_custom_call.1} parent=5 // pred_fallthru
        _
      %p128 = scmp.lt.s32.totalorder %s17, 2
      // Predicated region
      $region13: #{tpu_custom_call.1} parent=5 // pred_check
        %p129 = pneg %p128
      $region14: #{tpu_custom_call.1} parent=5 // pred_check_branch
        %131 = sbr.rel (%p129) target = $region16
      $region15: #{tpu_custom_call.1} parent=5 // pred_region
        // Predicated region
        $region17: #{tpu_custom_call.1} parent=15 // pred_check
          %p132 = pneg %p51
        $region18: #{tpu_custom_call.1} parent=15 // pred_check_branch
          %134 = sbr.rel (%p132) target = $region20
        $region19: #{tpu_custom_call.1} parent=15 // pred_region
          %s135 = sand.u32 %s41, 1
          %s136 = scalar_lea.sflag [#allocation3], %s135
          %s137 = sand.u32 %s41, 1
          %s138 = smul.addr %s137, 32
          %s139 = scalar_lea.vmem [#allocation2], %s138
          %s141 = ssub.s32 512, 512
          %142 = vsyncadd %s136, %s141
          %s143 = smul.addr %s24, 4
          %s144 = sadd.s32 %s25, %s143
          %s145 = smul.addr %s144, 128
          %s146 = scalar_lea.hbm %s0, %s145
          %s147 = sshll.u32 %s139, 4
          %s148 = int_to_ptr.vmem [resolvable:$true] %s147
          %153 = dma.hbm_to_vmem [thread:$0]  %s146, 512, %s148, %s136, 128, 128, 8
        $region20: #{tpu_custom_call.1} parent=15 // pred_fallthru
          _
        // Predicated region
        $region21: #{tpu_custom_call.1} parent=15 // pred_check
          %p154 = pneg %p79
        $region22: #{tpu_custom_call.1} parent=15 // pred_check_branch
          %156 = sbr.rel (%p154) target = $region24
        $region23: #{tpu_custom_call.1} parent=15 // pred_region
          %s157 = sand.u32 %s69, 1
          %s158 = scalar_lea.sflag [#allocation6], %s157
          %s159 = sand.u32 %s69, 1
          %s160 = smul.addr %s159, 8
          %s161 = scalar_lea.vmem [#allocation5], %s160
          %s163 = ssub.s32 128, 128
          %164 = vsyncadd %s158, %s163
          %s165 = sadd.s32 %s25, %s24
          %s166 = smul.addr %s165, 128
          %s167 = scalar_lea.hbm %s1, %s166
          %s169 = sshll.u32 %s161, 4
          %s170 = int_to_ptr.vmem [resolvable:$true] %s169
          %172 = dma.hbm_to_vmem [thread:$0]  %s167, 128, %s170, %s158
        $region24: #{tpu_custom_call.1} parent=15 // pred_fallthru
          _
      $region16: #{tpu_custom_call.1} parent=5 // pred_fallthru
        _
      %p173 = scmp.le.s32.totalorder 1, %s17
      %p174 = scmp.lt.s32.totalorder %s17, 3
      %p175 = pnand %p173, %p174
      %p176 = pneg %p175
      // Predicated region
      $region25: #{tpu_custom_call.1} parent=5 // pred_check
        _
      $region26: #{tpu_custom_call.1} parent=5 // pred_check_branch
        %178 = sbr.rel (%p175) target = $region28
      $region27: #{tpu_custom_call.1} parent=5 // pred_region
        %s179 = ssub.s32 %s17, 1
        %s180 = sand.u32 %s44, 1
        %s181 = scalar_lea.sflag [#allocation3], %s180
        %s182 = sand.u32 %s44, 1
        %s183 = smul.addr %s182, 32
        %s184 = scalar_lea.vmem [#allocation2], %s183
        // Predicated region
        $region29: #{tpu_custom_call.1} parent=27 // pred_check
          %p185 = pneg %p57
        $region30: #{tpu_custom_call.1} parent=27 // pred_check_branch
          %187 = sbr.rel (%p185) target = $region32
        $region31: #{tpu_custom_call.1} parent=27 // pred_region
          %188 = dma.done %s181, 512
        $region32: #{tpu_custom_call.1} parent=27 // pred_fallthru
          _
        %s189 = sand.u32 %s72, 1
        %s190 = scalar_lea.sflag [#allocation6], %s189
        %s191 = sand.u32 %s72, 1
        %s192 = smul.addr %s191, 8
        %s193 = scalar_lea.vmem [#allocation5], %s192
        // Predicated region
        $region33: #{tpu_custom_call.1} parent=27 // pred_check
          %p194 = pneg %p85
        $region34: #{tpu_custom_call.1} parent=27 // pred_check_branch
          %196 = sbr.rel (%p194) target = $region36
        $region35: #{tpu_custom_call.1} parent=27 // pred_region
          %197 = dma.done %s190, 128
        $region36: #{tpu_custom_call.1} parent=27 // pred_fallthru
          _
        %s198 = sand.u32 %s44, 1
        %s199 = scalar_lea.sflag [#allocation3], %s198
        %s200 = sand.u32 %s44, 1
        %s201 = smul.addr %s200, 32
        %s202 = scalar_lea.vmem [#allocation2], %s201
        %p203 = pneg %p57
        %p204 = pneg %p54
        %s205 = sand.u32 %s72, 1
        %s206 = scalar_lea.sflag [#allocation6], %s205
        %s207 = sand.u32 %s72, 1
        %s208 = smul.addr %s207, 8
        %s209 = scalar_lea.vmem [#allocation5], %s208
        %p210 = pneg %p85
        %p211 = pneg %p82
        %p212 = pneg %p113
        %p213 = pneg %p110
        %s214 = sand.u32 %s100, 1
        %s215 = scalar_lea.sflag [#allocation4], %s214
        %s216 = sand.u32 %s100, 1
        %s217 = smul.addr %s216, 32
        %s218 = scalar_lea.vmem [#allocation7], %s217
        %v219 = vld [vmem:[%s193] sm:$0xff]
        %v220 = vld [vmem:[%s184] sm:$0xff]
        %221 = vmax.xlane.f32.xlu0 %v220
        %v222 = vpop.xlane.xlu0 %221
        %v223 = vsub.f32 %v220, %v222
        %v224 = vmul.f32 %v223, 1.442695
        %v225 = vpow.pop %v224
        %v226 = vmul.f32 %v225, %v219
        %227 = vadd.xlane.f32.xlu0 %v226
        %v228 = vpop.xlane.xlu0 %227
        %v229 = vrcp.pop %v228
        %v230 = vmul.f32 %v228, %v229
        %v231 = vsub.f32 2.0, %v230
        %v232 = vmul.f32 %v229, %v231
        %v233 = vmul.f32 %v226, %v232
        %234 = vst [vmem:[%s218] sm:$0xff] %v233
        %s235 = scalar_lea.vmem %s184, 8 [#allocation2]
        %v236 = vld [vmem:[%s235] sm:$0xff]
        %237 = vmax.xlane.f32.xlu0 %v236
        %v238 = vpop.xlane.xlu0 %237
        %v239 = vsub.f32 %v236, %v238
        %v240 = vmul.f32 %v239, 1.442695
        %v241 = vpow.pop %v240
        %v242 = vmul.f32 %v241, %v219
        %243 = vadd.xlane.f32.xlu0 %v242
        %v244 = vpop.xlane.xlu0 %243
        %v245 = vrcp.pop %v244
        %v246 = vmul.f32 %v244, %v245
        %v247 = vsub.f32 2.0, %v246
        %v248 = vmul.f32 %v245, %v247
        %v249 = vmul.f32 %v242, %v248
        %s250 = scalar_lea.vmem %s218, 8 [#allocation7]
        %251 = vst [vmem:[%s250] sm:$0xff] %v249
        %s252 = scalar_lea.vmem %s184, 16 [#allocation2]
        %v253 = vld [vmem:[%s252] sm:$0xff]
        %254 = vmax.xlane.f32.xlu0 %v253
        %v255 = vpop.xlane.xlu0 %254
        %v256 = vsub.f32 %v253, %v255
        %v257 = vmul.f32 %v256, 1.442695
        %v258 = vpow.pop %v257
        %v259 = vmul.f32 %v258, %v219
        %260 = vadd.xlane.f32.xlu0 %v259
        %v261 = vpop.xlane.xlu0 %260
        %v262 = vrcp.pop %v261
        %v263 = vmul.f32 %v261, %v262
        %v264 = vsub.f32 2.0, %v263
        %v265 = vmul.f32 %v262, %v264
        %v266 = vmul.f32 %v259, %v265
        %s267 = scalar_lea.vmem %s218, 16 [#allocation7]
        %268 = vst [vmem:[%s267] sm:$0xff] %v266
        %s269 = scalar_lea.vmem %s184, 24 [#allocation2]
        %v270 = vld [vmem:[%s269] sm:$0xff]
        %271 = vmax.xlane.f32.xlu0 %v270
        %v272 = vpop.xlane.xlu0 %271
        %v273 = vsub.f32 %v270, %v272
        %v274 = vmul.f32 %v273, 1.442695
        %v275 = vpow.pop %v274
        %v276 = vmul.f32 %v275, %v219
        %277 = vadd.xlane.f32.xlu0 %v276
        %v278 = vpop.xlane.xlu0 %277
        %v279 = vrcp.pop %v278
        %v280 = vmul.f32 %v278, %v279
        %v281 = vsub.f32 2.0, %v280
        %v282 = vmul.f32 %v279, %v281
        %v283 = vmul.f32 %v276, %v282
        %s284 = scalar_lea.vmem %s218, 24 [#allocation7]
        %285 = vst [vmem:[%s284] sm:$0xff] %v283
        %s286 = sand.u32 %s100, 1
        %s287 = scalar_lea.sflag [#allocation4], %s286
        %s288 = sand.u32 %s100, 1
        %s289 = smul.addr %s288, 32
        %s290 = scalar_lea.vmem [#allocation7], %s289
        // Predicated region
        $region37: #{tpu_custom_call.1} parent=27 // pred_check
          %p291 = pneg %p110
        $region38: #{tpu_custom_call.1} parent=27 // pred_check_branch
          %293 = sbr.rel (%p291) target = $region40
        $region39: #{tpu_custom_call.1} parent=27 // pred_region
          %s295 = ssub.s32 512, 512
          %296 = vsyncadd %s287, %s295
          %s297 = smul.addr %s26, 4
          %s298 = sadd.s32 %s27, %s297
          %s299 = smul.addr %s298, 128
          %s300 = scalar_lea.hbm %s2, %s299
          %s301 = sshll.u32 %s290, 4
          %s302 = int_to_ptr.vmem [resolvable:$true] %s301
          %307 = dma.vmem_to_hbm [thread:$0]  %s302, 512, %s300, %s287, 128, 128, 8
        $region40: #{tpu_custom_call.1} parent=27 // pred_fallthru
          _
      $region28: #{tpu_custom_call.1} parent=5 // pred_fallthru
        _
      %p308 = scmp.le.s32.totalorder 2, %s17
      // Predicated region
      $region41: #{tpu_custom_call.1} parent=5 // pred_check
        %p309 = pneg %p308
      $region42: #{tpu_custom_call.1} parent=5 // pred_check_branch
        %311 = sbr.rel (%p309) target = $region44
      $region43: #{tpu_custom_call.1} parent=5 // pred_region
        %s312 = ssub.s32 %s17, 2
        // Predicated region
        $region45: #{tpu_custom_call.1} parent=43 // pred_check
          %p313 = pneg %p116
        $region46: #{tpu_custom_call.1} parent=43 // pred_check_branch
          %315 = sbr.rel (%p313) target = $region48
        $region47: #{tpu_custom_call.1} parent=43 // pred_region
          %s316 = sand.u32 %s101, 1
          %s317 = scalar_lea.sflag [#allocation4], %s316
          %s318 = sand.u32 %s101, 1
          %s319 = smul.addr %s318, 32
          %s320 = scalar_lea.vmem [#allocation7], %s319
          %321 = dma.done %s317, 512
        $region48: #{tpu_custom_call.1} parent=43 // pred_fallthru
          _
      $region44: #{tpu_custom_call.1} parent=5 // pred_fallthru
        _
    $region6: #{tpu_custom_call.1} parent=1 // loop_footer
      %s21 = sadd.s32 1, %s17
    $region7: #{tpu_custom_call.1} parent=1 // loop_footer_branch
      %16 = sbr.rel target = $region3
    $region8: #{tpu_custom_call.1} parent=1 // loop_exit
      _
    %322 = vsyncpa [#allocation3], 1
    %s323 = scalar_lea.sflag [#allocation3], 1
    %324 = vsyncpa %s323, 1
    %325 = vsyncpa [#allocation6], 1
    %s326 = scalar_lea.sflag [#allocation6], 1
    %327 = vsyncpa %s326, 1
    %328 = vsyncpa [#allocation4], 1
    %s329 = scalar_lea.sflag [#allocation4], 1
    %330 = vsyncpa %s329, 1

</llo_original>
